<compile_context>
chip_gen: v7x
topology: tpu7x:2x2x1
jax: 0.10.0
libtpu: 0.0.40
codegen_flags: <defaults>
</compile_context>

<pallas_src>
import functools

import jax
import jax.numpy as jnp
from jax.experimental import pallas as pl
from jax.experimental.pallas import tpu as pltpu

LANE = 128


def _round_up(x, m):
    return (x + m - 1) // m * m


def _pad2d(a, rows, cols):
    pr, pc = rows - a.shape[0], cols - a.shape[1]
    if pr or pc:
        a = jnp.pad(a, ((0, pr), (0, pc)))
    return a


def _vmem_capacity_bytes():
    try:
        return int(pltpu.get_tpu_info().vmem_capacity_bytes)
    except Exception:
        return 64 * 2**20  # conservative fallback (v7x per-TC VMEM)


def _feature_align():
    # v6e / v7x MXUs are 256x256; v5e is 4x 128x128 -> keep 128 alignment there.
    try:
        kind = jax.devices()[0].device_kind.lower()
    except Exception:
        kind = ""
    if any(t in kind for t in ("v2", "v3", "v4", "v5")):
        return 128
    return 256


def _align_dim(d, align):
    d128 = _round_up(d, LANE)
    if align <= LANE or d128 <= LANE:
        return d128
    return _round_up(d, align)


# ----------------------------------------------------------------------------
# One-time parameter packing (off the per-call hot path).
# ----------------------------------------------------------------------------
def pack_mlp_params(w1, b1, w2, b2, w3, b3, *, compute_dtype=jnp.bfloat16,
                    align=None):
    """Pad feature dims to MXU-aligned sizes and cast weights once.

    Weights are [in, out] (PyTorch [out, in] transposed); biases [out] or [1,out].
    Pad targets are derived from each weight's own shape (hidden dim need not
    equal the input dim). Returns (packed_arrays, dims) with dims static ints.
    """
    if align is None:
        align = _feature_align()
    cdt = jnp.dtype(compute_dtype)
    D, H1 = w1.shape
    H1b, H2 = w2.shape
    H2b, O = w3.shape
    assert H1 == H1b and H2 == H2b, "weight shapes do not chain"
    Dp, H1p, H2p, Op = (_align_dim(d, align) for d in (D, H1, H2, O))
    w1p = _pad2d(w1, Dp, H1p).astype(cdt)
    w2p = _pad2d(w2, H1p, H2p).astype(cdt)
    w3p = _pad2d(w3, H2p, Op).astype(cdt)
    b1p = _pad2d(jnp.reshape(b1, (1, -1)), 1, H1p).astype(jnp.float32)
    b2p = _pad2d(jnp.reshape(b2, (1, -1)), 1, H2p).astype(jnp.float32)
    b3p = _pad2d(jnp.reshape(b3, (1, -1)), 1, Op).astype(jnp.float32)
    return (w1p, b1p, w2p, b2p, w3p, b3p), (D, H1, H2, O)


# ----------------------------------------------------------------------------
# Fused kernel: all weights VMEM-resident, grid over row tiles only.
# ----------------------------------------------------------------------------
def _mlp_kernel(x_ref, w1_ref, b1_ref, w2_ref, b2_ref, w3_ref, b3_ref, o_ref):
    cdt = w1_ref.dtype  # MXU input dtype (bf16 by default); f32 accumulate.
    y = jnp.dot(x_ref[...].astype(cdt), w1_ref[...],
                preferred_element_type=jnp.float32)
    y = jnp.maximum(y + b1_ref[...], 0.0)
    y = jnp.dot(y.astype(cdt), w2_ref[...], preferred_element_type=jnp.float32)
    y = jnp.maximum(y + b2_ref[...], 0.0)
    y = jnp.dot(y.astype(cdt), w3_ref[...], preferred_element_type=jnp.float32)
    o_ref[...] = (y + b3_ref[...]).astype(o_ref.dtype)


# ----------------------------------------------------------------------------
# K-tiled per-layer fallback (weight set too large to keep VMEM-resident).
# ----------------------------------------------------------------------------
def _linear_kernel(x_ref, w_ref, b_ref, o_ref, acc_ref, *, relu):
    @pl.when(pl.program_id(2) == 0)
    def _():
        acc_ref[...] = jnp.zeros_like(acc_ref)

    acc_ref[...] += jnp.dot(x_ref[...].astype(w_ref.dtype), w_ref[...],
                            preferred_element_type=jnp.float32)

    @pl.when(pl.program_id(2) == pl.num_programs(2) - 1)
    def _():
        y = acc_ref[...] + b_ref[...]
        if relu:
            y = jnp.maximum(y, 0.0)
        o_ref[...] = y.astype(o_ref.dtype)


def _linear(x, w, b, *, relu, out_dtype, tm=256, tn=256, tk=512):
    N, K = x.shape
    Kw, M = w.shape
    assert K == Kw and K % LANE == 0 and M % LANE == 0
    tm = min(tm, _round_up(N, 8))
    tn = tn if (tn <= M and M % tn == 0) else LANE
    tk = tk if (tk <= K and K % tk == 0) else LANE
    grid = (pl.cdiv(N, tm), M // tn, K // tk)
    return pl.pallas_call(
        functools.partial(_linear_kernel, relu=relu),
        out_shape=jax.ShapeDtypeStruct((N, M), out_dtype),
        grid_spec=pltpu.PrefetchScalarGridSpec(
            num_scalar_prefetch=0,
            grid=grid,
            in_specs=[
                pl.BlockSpec((tm, tk), lambda i, j, k: (i, k)),
                pl.BlockSpec((tk, tn), lambda i, j, k: (k, j)),
                pl.BlockSpec((1, tn), lambda i, j, k: (0, j)),
            ],
            out_specs=pl.BlockSpec((tm, tn), lambda i, j, k: (i, j)),
            scratch_shapes=[pltpu.VMEM((tm, tn), jnp.float32)],
        ),
        compiler_params=pltpu.CompilerParams(
            dimension_semantics=("parallel", "parallel", "arbitrary")),
    )(x, w, b)


def _mlp_layerwise(xp, w1p, b1p, w2p, b2p, w3p, b3p, *, out_dim, out_dtype):
    # TODO(synk): intermediates round-trip through HBM; acceptable fallback for
    # weight sets too large to keep fully VMEM-resident (e.g. big D on v7x).
    cdt = w1p.dtype
    inter = cdt if jnp.dtype(cdt).itemsize < 4 else jnp.dtype(jnp.float32)
    y = _linear(xp, w1p, b1p, relu=True, out_dtype=inter)
    y = _linear(y, w2p, b2p, relu=True, out_dtype=inter)
    y = _linear(y, w3p, b3p, relu=False, out_dtype=out_dtype)
    return y[:, :out_dim]


# ----------------------------------------------------------------------------
# Forward pass (packed params).
# ----------------------------------------------------------------------------
@functools.partial(jax.jit,
                   static_argnames=("dims", "block_rows", "force_layerwise"))
def mlp_layer_packed(x, w1p, b1p, w2p, b2p, w3p, b3p, *, dims,
                     block_rows=512, force_layerwise=False):
    """Fused 3-layer MLP: (Linear+ReLU) x 2, then Linear. x: [N, D] f32/bf16."""
    N, D = x.shape
    D0, _, _, O = dims
    assert D == D0, "x feature dim does not match packed params"
    Dp, H1p = w1p.shape
    H2p = w2p.shape[1]
    Op = w3p.shape[1]
    out_dtype = x.dtype
    cdt = w1p.dtype
    cbytes = jnp.dtype(cdt).itemsize

    # Only the feature dim of x is zero-padded (real zeros -> padded K columns
    # contribute exactly 0). Rows are NOT padded: the ragged last row tile is
    # handled by the cdiv grid (garbage rows only affect discarded output rows).
    xp = _pad2d(x, N, Dp) if Dp != D else x

    # Generation-aware VMEM budget (128 MiB on v5e/v6e, 64 MiB per-TC on v7x),
    # keeping ~8-16 MiB headroom for Mosaic internal scratch.
    capacity = _vmem_capacity_bytes()
    budget = capacity - max(8 * 2**20, capacity // 8)

    # Resident weights are memory_space-only specs -> single-buffered (counted once).
    weight_bytes = (Dp * H1p + H1p * H2p + H2p * Op) * cbytes + (H1p + H2p + Op) * 4
    max_h = max(H1p, H2p, Op)
    per_row = (2 * Dp * xp.dtype.itemsize            # double-buffered x tile
               + 2 * Op * jnp.dtype(out_dtype).itemsize  # double-buffered out tile
               + 3 * max_h * 4 + 2 * max_h * cbytes)     # f32 temps + bf16 copies

    # Row tile: as large as VMEM allows, capped so the row grid has >= 2 steps
    # (keeps both v7x TensorCores busy via the "parallel" row axis).
    br = min(block_rows, _round_up(N, 8))
    if N > 8:
        br = min(br, _round_up(pl.cdiv(N, 2), 8))
    rows_fit = (budget - weight_bytes) // per_row if budget > weight_bytes else 0
    rows_fit = (rows_fit // 8) * 8
    br = min(br, rows_fit)

    if force_layerwise or br < 8:
        # Weight set does not fit VMEM-resident: K-tiled per-layer fallback.
        return _mlp_layerwise(xp, w1p, b1p, w2p, b2p, w3p, b3p,
                              out_dim=O, out_dtype=out_dtype)

    grid = (pl.cdiv(N, br),)
    est = weight_bytes + br * per_row
    vmem_limit = int(min(capacity, max(est + 16 * 2**20, 32 * 2**20)))

    flops = 2 * N * (Dp * H1p + H1p * H2p + H2p * Op)
    bytes_accessed = (xp.size * xp.dtype.itemsize + weight_bytes
                      + N * Op * jnp.dtype(out_dtype).itemsize)

    # Whole-array VMEM residents: copied in once, no per-grid-step re-DMA.
    # TODO(synk): optional fp8 weight path on v7x would halve resident VMEM again.
    resident = pl.BlockSpec(memory_space=pltpu.MemorySpace.VMEM)

    out_padded = pl.pallas_call(
        _mlp_kernel,
        out_shape=jax.ShapeDtypeStruct((N, Op), out_dtype),
        grid_spec=pltpu.PrefetchScalarGridSpec(
            num_scalar_prefetch=0,
            grid=grid,
            in_specs=[
                pl.BlockSpec((br, Dp), lambda i: (i, 0)),  # x row tile (f32 in HBM)
                resident, resident,                        # w1, b1
                resident, resident,                        # w2, b2
                resident, resident,                        # w3, b3
            ],
            out_specs=pl.BlockSpec((br, Op), lambda i: (i, 0)),
        ),
        compiler_params=pltpu.CompilerParams(
            dimension_semantics=("parallel",),   # row axis shards across TCs on v7x
            vmem_limit_bytes=vmem_limit,
        ),
        cost_estimate=pl.CostEstimate(flops=flops, transcendentals=0,
                                      bytes_accessed=bytes_accessed),
    )(xp, w1p, b1p, w2p, b2p, w3p, b3p)

    return out_padded[:, :O]


def mlp_layer(x, w1, b1, w2, b2, w3, b3, *, compute_dtype=jnp.bfloat16, **kw):
    """Convenience wrapper (packs per call; prefer pack_mlp_params + packed fn)."""
    packed, dims = pack_mlp_params(w1, b1, w2, b2, w3, b3,
                                   compute_dtype=compute_dtype)
    return mlp_layer_packed(x, *packed, dims=dims, **kw)


def init_mlp_params(key, input_dim, output_dim, L=2, dtype=jnp.float32):
    """nn.Linear-style init (uniform +-1/sqrt(fan_in)); weights already [in,out]."""
    dims = [(input_dim, input_dim)] * L + [(input_dim, output_dim)]
    params = []
    for (fan_in, fan_out) in dims:
        key, kw, kb = jax.random.split(key, 3)
        bound = 1.0 / jnp.sqrt(fan_in)
        w = jax.random.uniform(kw, (fan_in, fan_out), dtype,
                               minval=-bound, maxval=bound)
        b = jax.random.uniform(kb, (1, fan_out), dtype,
                               minval=-bound, maxval=bound)
        params += [w, b]
    return params


if __name__ == "__main__":
    import numpy as np

    key = jax.random.PRNGKey(0)

    def ref_np(x, w1, b1, w2, b2, w3, b3):
        f = lambda a: np.asarray(a, dtype=np.float64)
        y = np.maximum(f(x) @ f(w1) + f(b1), 0.0)
        y = np.maximum(y @ f(w2) + f(b2), 0.0)
        return y @ f(w3) + f(b3)

    def max_rel(a, b):
        a = np.asarray(a, np.float64)
        return float(np.max(np.abs(a - b)) / (np.max(np.abs(b)) + 1e-12))

    # Case 1: f32 MXU inputs at the module's natural small shapes; tight check.
    N, D, O = 8, 32, 16
    key, kx = jax.random.split(key)
    x = jax.random.normal(kx, (N, D), dtype=jnp.float32)
    params = init_mlp_params(key, D, O, L=2)
    packed_f32, dims = pack_mlp_params(*params, compute_dtype=jnp.float32)
    out = jax.block_until_ready(mlp_layer_packed(x, *packed_f32, dims=dims))
    ref = ref_np(x, *params)
    assert out.shape == (N, O)
    assert max_rel(out, ref) < 1e-3, f"f32 mismatch: rel={max_rel(out, ref)}"

    # Case 2: default bf16 MXU inputs; exercises row grid > 1, ragged last row
    # tile (N not a multiple of the tile), and lane padding (D=96, O=40 < 128).
    N2, D2, O2 = 300, 96, 40
    key, kx2 = jax.random.split(key)
    x2 = jax.random.normal(kx2, (N2, D2), dtype=jnp.float32)
    params2 = init_mlp_params(key, D2, O2, L=2)
    packed_bf16, dims2 = pack_mlp_params(*params2)  # bf16 default
    out2 = jax.block_until_ready(mlp_layer_packed(x2, *packed_bf16, dims=dims2))
    ref2 = ref_np(x2, *params2)
    assert out2.shape == (N2, O2)
    assert max_rel(out2, ref2) < 5e-2, f"bf16 mismatch: rel={max_rel(out2, ref2)}"

    # Case 3: K-tiled per-layer fallback (the path taken when the weight set is
    # too large to stay VMEM-resident, e.g. very large D on v7x), forced here.
    packed2_f32, dims2b = pack_mlp_params(*params2, compute_dtype=jnp.float32)
    out3 = jax.block_until_ready(
        mlp_layer_packed(x2, *packed2_f32, dims=dims2b, force_layerwise=True))
    assert out3.shape == (N2, O2)
    assert max_rel(out3, ref2) < 1e-3, f"layerwise mismatch: rel={max_rel(out3, ref2)}"

    print("KERNEL_OK")
</pallas_src>

<mosaic_0001>
module attributes {stable_mosaic.version = 11 : i64} {
  func.func @_mlp_kernel(%arg0: i32, %arg1: memref<8x128xf32, #tpu.memory_space<vmem>>, %arg2: memref<128x128xf32, #tpu.memory_space<vmem>>, %arg3: memref<1x128xf32, #tpu.memory_space<vmem>>, %arg4: memref<128x128xf32, #tpu.memory_space<vmem>>, %arg5: memref<1x128xf32, #tpu.memory_space<vmem>>, %arg6: memref<128x128xf32, #tpu.memory_space<vmem>>, %arg7: memref<1x128xf32, #tpu.memory_space<vmem>>, %arg8: memref<8x128xf32, #tpu.memory_space<vmem>>) attributes {dimension_semantics = [#tpu.dimension_semantics<parallel>], iteration_bounds = array<i64: 1>, scalar_prefetch = 0 : i64, scratch_operands = 0 : i64, tpu.core_type = #tpu.core_type<tc>, window_params = [{transform_indices = @transform_0, window_bounds = array<i64: 8, 128>}, {pipeline_mode = #tpu.pipeline_mode<synchronous>, transform_indices = @transform_1, window_bounds = array<i64: 128, 128>}, {pipeline_mode = #tpu.pipeline_mode<synchronous>, transform_indices = @transform_2, window_bounds = array<i64: 1, 128>}, {pipeline_mode = #tpu.pipeline_mode<synchronous>, transform_indices = @transform_3, window_bounds = array<i64: 128, 128>}, {pipeline_mode = #tpu.pipeline_mode<synchronous>, transform_indices = @transform_4, window_bounds = array<i64: 1, 128>}, {pipeline_mode = #tpu.pipeline_mode<synchronous>, transform_indices = @transform_5, window_bounds = array<i64: 128, 128>}, {pipeline_mode = #tpu.pipeline_mode<synchronous>, transform_indices = @transform_6, window_bounds = array<i64: 1, 128>}, {transform_indices = @transform_7, window_bounds = array<i64: 8, 128>}]} {
    %c0 = arith.constant 0 : index
    %c0_0 = arith.constant 0 : index
    %0 = vector.load %arg1[%c0, %c0_0] : memref<8x128xf32, #tpu.memory_space<vmem>>, vector<8x128xf32>
    %c0_1 = arith.constant 0 : index
    %c0_2 = arith.constant 0 : index
    %1 = vector.load %arg2[%c0_1, %c0_2] : memref<128x128xf32, #tpu.memory_space<vmem>>, vector<128x128xf32>
    %cst = arith.constant dense<0.000000e+00> : vector<8x128xf32>
    %2 = tpu.matmul %0, %1, %cst {dimension_numbers = #tpu.dot_dimension_numbers<[1], [0], [0], [1], [0, 0, 1, 1], [], []>} : vector<8x128xf32>, vector<128x128xf32>, vector<8x128xf32> -> vector<8x128xf32>
    %c0_3 = arith.constant 0 : index
    %c0_4 = arith.constant 0 : index
    %3 = vector.load %arg3[%c0_3, %c0_4] : memref<1x128xf32, #tpu.memory_space<vmem>>, vector<1x128xf32>
    %4 = vector.broadcast %3 : vector<1x128xf32> to vector<8x128xf32>
    %5 = arith.addf %2, %4 : vector<8x128xf32>
    %cst_5 = arith.constant 0.000000e+00 : f32
    %6 = vector.broadcast %cst_5 : f32 to vector<8x128xf32>
    %7 = arith.maximumf %5, %6 : vector<8x128xf32>
    %c0_6 = arith.constant 0 : index
    %c0_7 = arith.constant 0 : index
    %8 = vector.load %arg4[%c0_6, %c0_7] : memref<128x128xf32, #tpu.memory_space<vmem>>, vector<128x128xf32>
    %cst_8 = arith.constant dense<0.000000e+00> : vector<8x128xf32>
    %9 = tpu.matmul %7, %8, %cst_8 {dimension_numbers = #tpu.dot_dimension_numbers<[1], [0], [0], [1], [0, 0, 1, 1], [], []>} : vector<8x128xf32>, vector<128x128xf32>, vector<8x128xf32> -> vector<8x128xf32>
    %c0_9 = arith.constant 0 : index
    %c0_10 = arith.constant 0 : index
    %10 = vector.load %arg5[%c0_9, %c0_10] : memref<1x128xf32, #tpu.memory_space<vmem>>, vector<1x128xf32>
    %11 = vector.broadcast %10 : vector<1x128xf32> to vector<8x128xf32>
    %12 = arith.addf %9, %11 : vector<8x128xf32>
    %cst_11 = arith.constant 0.000000e+00 : f32
    %13 = vector.broadcast %cst_11 : f32 to vector<8x128xf32>
    %14 = arith.maximumf %12, %13 : vector<8x128xf32>
    %c0_12 = arith.constant 0 : index
    %c0_13 = arith.constant 0 : index
    %15 = vector.load %arg6[%c0_12, %c0_13] : memref<128x128xf32, #tpu.memory_space<vmem>>, vector<128x128xf32>
    %cst_14 = arith.constant dense<0.000000e+00> : vector<8x128xf32>
    %16 = tpu.matmul %14, %15, %cst_14 {dimension_numbers = #tpu.dot_dimension_numbers<[1], [0], [0], [1], [0, 0, 1, 1], [], []>} : vector<8x128xf32>, vector<128x128xf32>, vector<8x128xf32> -> vector<8x128xf32>
    %c0_15 = arith.constant 0 : index
    %c0_16 = arith.constant 0 : index
    %17 = vector.load %arg7[%c0_15, %c0_16] : memref<1x128xf32, #tpu.memory_space<vmem>>, vector<1x128xf32>
    %18 = vector.broadcast %17 : vector<1x128xf32> to vector<8x128xf32>
    %19 = arith.addf %16, %18 : vector<8x128xf32>
    %c0_17 = arith.constant 0 : index
    %c0_18 = arith.constant 0 : index
    %20 = vector.load %arg8[%c0_17, %c0_18] : memref<8x128xf32, #tpu.memory_space<vmem>>, vector<8x128xf32>
    tpu.vector_store %arg8[%c0_17, %c0_18], %19 {strides = array<i32>} : memref<8x128xf32, #tpu.memory_space<vmem>>, vector<8x128xf32>,
    return
  }
  func.func @transform_0(%arg0: i32) -> (i32, i32) {
    %c0_i32 = arith.constant 0 : i32
    %c0_i32_0 = arith.constant 0 : i32
    return %arg0, %c0_i32 : i32, i32
  }
  func.func @transform_1(%arg0: i32) -> (i32, i32) {
    %c0_i32 = arith.constant 0 : i32
    %c0_i32_0 = arith.constant 0 : i32
    %c0_i32_1 = arith.constant 0 : i32
    return %c0_i32, %c0_i32_0 : i32, i32
  }
  func.func @transform_2(%arg0: i32) -> (i32, i32) {
    %c0_i32 = arith.constant 0 : i32
    %c0_i32_0 = arith.constant 0 : i32
    %c0_i32_1 = arith.constant 0 : i32
    return %c0_i32, %c0_i32_0 : i32, i32
  }
  func.func @transform_3(%arg0: i32) -> (i32, i32) {
    %c0_i32 = arith.constant 0 : i32
    %c0_i32_0 = arith.constant 0 : i32
    %c0_i32_1 = arith.constant 0 : i32
    return %c0_i32, %c0_i32_0 : i32, i32
  }
  func.func @transform_4(%arg0: i32) -> (i32, i32) {
    %c0_i32 = arith.constant 0 : i32
    %c0_i32_0 = arith.constant 0 : i32
    %c0_i32_1 = arith.constant 0 : i32
    return %c0_i32, %c0_i32_0 : i32, i32
  }
  func.func @transform_5(%arg0: i32) -> (i32, i32) {
    %c0_i32 = arith.constant 0 : i32
    %c0_i32_0 = arith.constant 0 : i32
    %c0_i32_1 = arith.constant 0 : i32
    return %c0_i32, %c0_i32_0 : i32, i32
  }
  func.func @transform_6(%arg0: i32) -> (i32, i32) {
    %c0_i32 = arith.constant 0 : i32
    %c0_i32_0 = arith.constant 0 : i32
    %c0_i32_1 = arith.constant 0 : i32
    return %c0_i32, %c0_i32_0 : i32, i32
  }
  func.func @transform_7(%arg0: i32) -> (i32, i32) {
    %c0_i32 = arith.constant 0 : i32
    %c0_i32_0 = arith.constant 0 : i32
    return %arg0, %c0_i32 : i32, i32
  }
}

</mosaic_0001>

<llo_original>
// kernel: mlp_layer_packed.1
$region0: #{mlp_layer_packed.1}
  #allocation0 [shape = 'u32[]', space=smem, size = 0x4, offset = 0x4, fixed_abs, tag = 'smem constant byte address 0x4 - core index']
  #allocation1 [shape = 'u32[144,128]{1,0:T(1,128)}', space=vmem, size = 0x12000, scoped, tag = 'internal scratch']
  %s0 = inlined_call_operand.vmem [shape: f32[8,128], index: 0, kind: input, shape index: {}]
  %s1 = inlined_call_operand.hbm [shape: f32[128,128], index: 1, kind: input, shape index: {}]
  %s2 = inlined_call_operand.vmem [shape: f32[1,128], index: 2, kind: input, shape index: {}]
  %s3 = inlined_call_operand.hbm [shape: f32[128,128], index: 3, kind: input, shape index: {}]
  %s4 = inlined_call_operand.vmem [shape: f32[1,128], index: 4, kind: input, shape index: {}]
  %s5 = inlined_call_operand.hbm [shape: f32[128,128], index: 5, kind: input, shape index: {}]
  %s6 = inlined_call_operand.vmem [shape: f32[1,128], index: 6, kind: input, shape index: {}]
  %s7 = inlined_call_operand.hbm [shape: f32[8,128], index: 7, kind: output, shape index: {}]
  %s8 = sld [smem:[#allocation0]]
  $region50: #{mlp_layer_packed.1} parent=0
    _
  %s10 = ssub.s32 1, %s8
  %s11 = scalar_select 0, %s10, %s8
  $region1: #{mlp_layer_packed.1} parent=0
    #allocation2 [shape = 'u8[65536]{0}', space=vmem, size = 0x10000, scoped, tag = 'input window, operand 1, single buffered']
    #allocation3 [shape = 's32[1]{0}', space=sflag, size = 0x4, scoped, tag = 'scoped memory for mlp_layer_packed.1']
    #allocation4 [shape = 's32[1]{0}', space=sflag, size = 0x4, scoped, tag = 'scoped memory for mlp_layer_packed.1']
    #allocation5 [shape = 'u8[65536]{0}', space=vmem, size = 0x10000, scoped, tag = 'input window, operand 3, single buffered']
    #allocation6 [shape = 's32[1]{0}', space=sflag, size = 0x4, scoped, tag = 'scoped memory for mlp_layer_packed.1']
    #allocation7 [shape = 'u8[65536]{0}', space=vmem, size = 0x10000, scoped, tag = 'input window, operand 5, single buffered']
    #allocation8 [shape = 'u8[4096]{0}', space=vmem, size = 0x1000, scoped, tag = 'output window, operand 0, single buffered']
    %12 = vsyncpa [#allocation3], 0
    %13 = vsyncpa [#allocation6], 0
    %14 = vsyncpa [#allocation4], 0
    // Predicated region
    $region2: #{mlp_layer_packed.1} parent=1 // pred_check
      _
    $region3: #{mlp_layer_packed.1} parent=1 // pred_check_branch
      %16 = sbr.rel (0) target = $region5
    $region4: #{mlp_layer_packed.1} parent=1 // pred_region
      _
    $region5: #{mlp_layer_packed.1} parent=1 // pred_fallthru
      _
    // Predicated region
    $region6: #{mlp_layer_packed.1} parent=1 // pred_check
      _
    $region7: #{mlp_layer_packed.1} parent=1 // pred_check_branch
      %18 = sbr.rel (0) target = $region9
    $region8: #{mlp_layer_packed.1} parent=1 // pred_region
      %s20 = ssub.s32 2048, 2048
      %21 = vsyncadd [#allocation3], %s20
      %s22 = sshll.u32 [#allocation2], 4
      %s23 = int_to_ptr.vmem [resolvable:$true] %s22
      %28 = dma.hbm_to_vmem [thread:$0]  %s1, 2048, %s23, [#allocation3], 128, 128, 8
    $region9: #{mlp_layer_packed.1} parent=1 // pred_fallthru
      _
    // Predicated region
    $region10: #{mlp_layer_packed.1} parent=1 // pred_check
      _
    $region11: #{mlp_layer_packed.1} parent=1 // pred_check_branch
      %30 = sbr.rel (0) target = $region13
    $region12: #{mlp_layer_packed.1} parent=1 // pred_region
      _
    $region13: #{mlp_layer_packed.1} parent=1 // pred_fallthru
      _
    // Predicated region
    $region14: #{mlp_layer_packed.1} parent=1 // pred_check
      _
    $region15: #{mlp_layer_packed.1} parent=1 // pred_check_branch
      %32 = sbr.rel (0) target = $region17
    $region16: #{mlp_layer_packed.1} parent=1 // pred_region
      %s34 = ssub.s32 2048, 2048
      %35 = vsyncadd [#allocation6], %s34
      %s36 = sshll.u32 [#allocation5], 4
      %s37 = int_to_ptr.vmem [resolvable:$true] %s36
      %42 = dma.hbm_to_vmem [thread:$0]  %s3, 2048, %s37, [#allocation6], 128, 128, 8
    $region17: #{mlp_layer_packed.1} parent=1 // pred_fallthru
      _
    // Predicated region
    $region18: #{mlp_layer_packed.1} parent=1 // pred_check
      _
    $region19: #{mlp_layer_packed.1} parent=1 // pred_check_branch
      %44 = sbr.rel (0) target = $region21
    $region20: #{mlp_layer_packed.1} parent=1 // pred_region
      _
    $region21: #{mlp_layer_packed.1} parent=1 // pred_fallthru
      _
    // Predicated region
    $region22: #{mlp_layer_packed.1} parent=1 // pred_check
      _
    $region23: #{mlp_layer_packed.1} parent=1 // pred_check_branch
      %46 = sbr.rel (0) target = $region25
    $region24: #{mlp_layer_packed.1} parent=1 // pred_region
      %s48 = ssub.s32 2048, 2048
      %49 = vsyncadd [#allocation6], %s48
      %s50 = sshll.u32 [#allocation7], 4
      %s51 = int_to_ptr.vmem [resolvable:$true] %s50
      %56 = dma.hbm_to_vmem [thread:$0]  %s5, 2048, %s51, [#allocation6], 128, 128, 8
    $region25: #{mlp_layer_packed.1} parent=1 // pred_fallthru
      _
    // Predicated region
    $region26: #{mlp_layer_packed.1} parent=1 // pred_check
      _
    $region27: #{mlp_layer_packed.1} parent=1 // pred_check_branch
      %58 = sbr.rel (0) target = $region29
    $region28: #{mlp_layer_packed.1} parent=1 // pred_region
      _
    $region29: #{mlp_layer_packed.1} parent=1 // pred_fallthru
      _
    // Predicated region
    $region30: #{mlp_layer_packed.1} parent=1 // pred_check
      _
    $region31: #{mlp_layer_packed.1} parent=1 // pred_check_branch
      %60 = sbr.rel (0) target = $region33
    $region32: #{mlp_layer_packed.1} parent=1 // pred_region
      %61 = dma.done [#allocation3], 2048
    $region33: #{mlp_layer_packed.1} parent=1 // pred_fallthru
      _
    // Predicated region
    $region34: #{mlp_layer_packed.1} parent=1 // pred_check
      _
    $region35: #{mlp_layer_packed.1} parent=1 // pred_check_branch
      %63 = sbr.rel (0) target = $region37
    $region36: #{mlp_layer_packed.1} parent=1 // pred_region
      %64 = dma.done [#allocation6], 2048
    $region37: #{mlp_layer_packed.1} parent=1 // pred_fallthru
      _
    // Predicated region
    $region38: #{mlp_layer_packed.1} parent=1 // pred_check
      _
    $region39: #{mlp_layer_packed.1} parent=1 // pred_check_branch
      %66 = sbr.rel (0) target = $region41
    $region40: #{mlp_layer_packed.1} parent=1 // pred_region
      %67 = dma.done [#allocation6], 2048
    $region41: #{mlp_layer_packed.1} parent=1 // pred_fallthru
      _
    %v68 = vld [vmem:[%s0] sm:$0xff]
    %v69 = vld [vmem:[#allocation2] sm:$0xff]
    %v70 = vld [vmem:[#allocation2 + $0x8] sm:$0xff]
    %v71 = vld [vmem:[#allocation2 + $0x10] sm:$0xff]
    %v72 = vld [vmem:[#allocation2 + $0x18] sm:$0xff]
    %v73 = vld [vmem:[#allocation2 + $0x20] sm:$0xff]
    %v74 = vld [vmem:[#allocation2 + $0x28] sm:$0xff]
    %v75 = vld [vmem:[#allocation2 + $0x30] sm:$0xff]
    %v76 = vld [vmem:[#allocation2 + $0x38] sm:$0xff]
    %v77 = vld [vmem:[#allocation2 + $0x40] sm:$0xff]
    %v78 = vld [vmem:[#allocation2 + $0x48] sm:$0xff]
    %v79 = vld [vmem:[#allocation2 + $0x50] sm:$0xff]
    %v80 = vld [vmem:[#allocation2 + $0x58] sm:$0xff]
    %v81 = vld [vmem:[#allocation2 + $0x60] sm:$0xff]
    %v82 = vld [vmem:[#allocation2 + $0x68] sm:$0xff]
    %v83 = vld [vmem:[#allocation2 + $0x70] sm:$0xff]
    %v84 = vld [vmem:[#allocation2 + $0x78] sm:$0xff]
    %v85 = vld [vmem:[%s2] sm:$0x1]
    %v87 = vlaneseq
    %v88 = vshrl.u32 %v87, 7
    %v89 = vsub.s32 0, %v88
    %v90 = vrot.slane %v85, %v89
    %92 = vmatprep.subr.mxu0 0.0
    %93 = vmatpush1.msra.mxu0 %v69
    %94 = vmatprep.subr.mxu0 0.0
    %95 = vmatpush1.msra.mxu0 %v70
    %96 = vmatprep.subr.mxu0 0.0
    %97 = vmatpush1.msra.mxu0 %v71
    %98 = vmatprep.subr.mxu0 0.0
    %99 = vmatpush1.msra.mxu0 %v72
    %100 = vmatprep.subr.mxu0 0.0
    %101 = vmatpush1.msra.mxu0 %v73
    %102 = vmatprep.subr.mxu0 0.0
    %103 = vmatpush1.msra.mxu0 %v74
    %104 = vmatprep.subr.mxu0 0.0
    %105 = vmatpush1.msra.mxu0 %v75
    %106 = vmatprep.subr.mxu0 0.0
    %107 = vmatpush1.msra.mxu0 %v76
    %108 = vmatprep.subr.mxu0 0.0
    %109 = vmatpush1.msra.mxu0 %v77
    %110 = vmatprep.subr.mxu0 0.0
    %111 = vmatpush1.msra.mxu0 %v78
    %112 = vmatprep.subr.mxu0 0.0
    %113 = vmatpush1.msra.mxu0 %v79
    %114 = vmatprep.subr.mxu0 0.0
    %115 = vmatpush1.msra.mxu0 %v80
    %116 = vmatprep.subr.mxu0 0.0
    %117 = vmatpush1.msra.mxu0 %v81
    %118 = vmatprep.subr.mxu0 0.0
    %119 = vmatpush1.msra.mxu0 %v82
    %120 = vmatprep.subr.mxu0 0.0
    %121 = vmatpush1.msra.mxu0 %v83
    %122 = vmatprep.subr.mxu0 0.0
    %123 = vmatpush1.msra.mxu0 %v84
    %124 = vmatprep.subr.mxu0 0.0
    %125 = vmatpush1.msra.mxu0 0.0
    %126 = vmatprep.subr.mxu0 0.0
    %127 = vmatpush1.msra.mxu0 0.0
    %128 = vmatprep.subr.mxu0 0.0
    %129 = vmatpush1.msra.mxu0 0.0
    %130 = vmatprep.subr.mxu0 0.0
    %131 = vmatpush1.msra.mxu0 0.0
    %132 = vmatprep.subr.mxu0 0.0
    %133 = vmatpush1.msra.mxu0 0.0
    %134 = vmatprep.subr.mxu0 0.0
    %135 = vmatpush1.msra.mxu0 0.0
    %136 = vmatprep.subr.mxu0 0.0
    %137 = vmatpush1.msra.mxu0 0.0
    %138 = vmatprep.subr.mxu0 0.0
    %139 = vmatpush1.msra.mxu0 0.0
    %140 = vmatprep.subr.mxu0 0.0
    %141 = vmatpush1.msra.mxu0 0.0
    %142 = vmatprep.subr.mxu0 0.0
    %143 = vmatpush1.msra.mxu0 0.0
    %144 = vmatprep.subr.mxu0 0.0
    %145 = vmatpush1.msra.mxu0 0.0
    %146 = vmatprep.subr.mxu0 0.0
    %147 = vmatpush1.msra.mxu0 0.0
    %148 = vmatprep.subr.mxu0 0.0
    %149 = vmatpush1.msra.mxu0 0.0
    %150 = vmatprep.subr.mxu0 0.0
    %151 = vmatpush1.msra.mxu0 0.0
    %152 = vmatprep.subr.mxu0 0.0
    %153 = vmatpush1.msra.mxu0 0.0
    %154 = vmatprep.subr.mxu0 0.0
    %155 = vmatpush1.msra.mxu0 0.0
    %156 = vmatprep.mubr.f32.mxu0 0.0
    %157 = vmatmul.mubr.f32.gmra.mrb[0].mxu0 %v68
    %v158 = vpop.f32.mrb[0].mxu0
    %v159 = vadd.f32 %v90, %v158
    %v160 = vpop.f32.mrb[0].mxu0
    %161 = vdwg.mxu0
    %v162 = vmax.f32 %v159, 0.0
    %v163 = vld [vmem:[#allocation5] sm:$0xff]
    %v164 = vld [vmem:[#allocation5 + $0x8] sm:$0xff]
    %v165 = vld [vmem:[#allocation5 + $0x10] sm:$0xff]
    %v166 = vld [vmem:[#allocation5 + $0x18] sm:$0xff]
    %v167 = vld [vmem:[#allocation5 + $0x20] sm:$0xff]
    %v168 = vld [vmem:[#allocation5 + $0x28] sm:$0xff]
    %v169 = vld [vmem:[#allocation5 + $0x30] sm:$0xff]
    %v170 = vld [vmem:[#allocation5 + $0x38] sm:$0xff]
    %v171 = vld [vmem:[#allocation5 + $0x40] sm:$0xff]
    %v172 = vld [vmem:[#allocation5 + $0x48] sm:$0xff]
    %v173 = vld [vmem:[#allocation5 + $0x50] sm:$0xff]
    %v174 = vld [vmem:[#allocation5 + $0x58] sm:$0xff]
    %v175 = vld [vmem:[#allocation5 + $0x60] sm:$0xff]
    %v176 = vld [vmem:[#allocation5 + $0x68] sm:$0xff]
    %v177 = vld [vmem:[#allocation5 + $0x70] sm:$0xff]
    %v178 = vld [vmem:[#allocation5 + $0x78] sm:$0xff]
    %v179 = vld [vmem:[%s4] sm:$0x1]
    %v181 = vlaneseq
    %v182 = vshrl.u32 %v181, 7
    %v183 = vsub.s32 0, %v182
    %v184 = vrot.slane %v179, %v183
    %186 = vmatprep.subr.mxu0 0.0
    %187 = vmatpush1.msra.mxu0 %v163
    %188 = vmatprep.subr.mxu0 0.0
    %189 = vmatpush1.msra.mxu0 %v164
    %190 = vmatprep.subr.mxu0 0.0
    %191 = vmatpush1.msra.mxu0 %v165
    %192 = vmatprep.subr.mxu0 0.0
    %193 = vmatpush1.msra.mxu0 %v166
    %194 = vmatprep.subr.mxu0 0.0
    %195 = vmatpush1.msra.mxu0 %v167
    %196 = vmatprep.subr.mxu0 0.0
    %197 = vmatpush1.msra.mxu0 %v168
    %198 = vmatprep.subr.mxu0 0.0
    %199 = vmatpush1.msra.mxu0 %v169
    %200 = vmatprep.subr.mxu0 0.0
    %201 = vmatpush1.msra.mxu0 %v170
    %202 = vmatprep.subr.mxu0 0.0
    %203 = vmatpush1.msra.mxu0 %v171
    %204 = vmatprep.subr.mxu0 0.0
    %205 = vmatpush1.msra.mxu0 %v172
    %206 = vmatprep.subr.mxu0 0.0
    %207 = vmatpush1.msra.mxu0 %v173
    %208 = vmatprep.subr.mxu0 0.0
    %209 = vmatpush1.msra.mxu0 %v174
    %210 = vmatprep.subr.mxu0 0.0
    %211 = vmatpush1.msra.mxu0 %v175
    %212 = vmatprep.subr.mxu0 0.0
    %213 = vmatpush1.msra.mxu0 %v176
    %214 = vmatprep.subr.mxu0 0.0
    %215 = vmatpush1.msra.mxu0 %v177
    %216 = vmatprep.subr.mxu0 0.0
    %217 = vmatpush1.msra.mxu0 %v178
    %218 = vmatprep.subr.mxu0 0.0
    %219 = vmatpush1.msra.mxu0 0.0
    %220 = vmatprep.subr.mxu0 0.0
    %221 = vmatpush1.msra.mxu0 0.0
    %222 = vmatprep.subr.mxu0 0.0
    %223 = vmatpush1.msra.mxu0 0.0
    %224 = vmatprep.subr.mxu0 0.0
    %225 = vmatpush1.msra.mxu0 0.0
    %226 = vmatprep.subr.mxu0 0.0
    %227 = vmatpush1.msra.mxu0 0.0
    %228 = vmatprep.subr.mxu0 0.0
    %229 = vmatpush1.msra.mxu0 0.0
    %230 = vmatprep.subr.mxu0 0.0
    %231 = vmatpush1.msra.mxu0 0.0
    %232 = vmatprep.subr.mxu0 0.0
    %233 = vmatpush1.msra.mxu0 0.0
    %234 = vmatprep.subr.mxu0 0.0
    %235 = vmatpush1.msra.mxu0 0.0
    %236 = vmatprep.subr.mxu0 0.0
    %237 = vmatpush1.msra.mxu0 0.0
    %238 = vmatprep.subr.mxu0 0.0
    %239 = vmatpush1.msra.mxu0 0.0
    %240 = vmatprep.subr.mxu0 0.0
    %241 = vmatpush1.msra.mxu0 0.0
    %242 = vmatprep.subr.mxu0 0.0
    %243 = vmatpush1.msra.mxu0 0.0
    %244 = vmatprep.subr.mxu0 0.0
    %245 = vmatpush1.msra.mxu0 0.0
    %246 = vmatprep.subr.mxu0 0.0
    %247 = vmatpush1.msra.mxu0 0.0
    %248 = vmatprep.subr.mxu0 0.0
    %249 = vmatpush1.msra.mxu0 0.0
    %250 = vmatprep.mubr.f32.mxu0 0.0
    %251 = vmatmul.mubr.f32.gmra.mrb[0].mxu0 %v162
    %v252 = vpop.f32.mrb[0].mxu0
    %v253 = vadd.f32 %v184, %v252
    %v254 = vpop.f32.mrb[0].mxu0
    %255 = vdwg.mxu0
    %v256 = vmax.f32 %v253, 0.0
    %v257 = vld [vmem:[#allocation7] sm:$0xff]
    %v258 = vld [vmem:[#allocation7 + $0x8] sm:$0xff]
    %v259 = vld [vmem:[#allocation7 + $0x10] sm:$0xff]
    %v260 = vld [vmem:[#allocation7 + $0x18] sm:$0xff]
    %v261 = vld [vmem:[#allocation7 + $0x20] sm:$0xff]
    %v262 = vld [vmem:[#allocation7 + $0x28] sm:$0xff]
    %v263 = vld [vmem:[#allocation7 + $0x30] sm:$0xff]
    %v264 = vld [vmem:[#allocation7 + $0x38] sm:$0xff]
    %v265 = vld [vmem:[#allocation7 + $0x40] sm:$0xff]
    %v266 = vld [vmem:[#allocation7 + $0x48] sm:$0xff]
    %v267 = vld [vmem:[#allocation7 + $0x50] sm:$0xff]
    %v268 = vld [vmem:[#allocation7 + $0x58] sm:$0xff]
    %v269 = vld [vmem:[#allocation7 + $0x60] sm:$0xff]
    %v270 = vld [vmem:[#allocation7 + $0x68] sm:$0xff]
    %v271 = vld [vmem:[#allocation7 + $0x70] sm:$0xff]
    %v272 = vld [vmem:[#allocation7 + $0x78] sm:$0xff]
    %v273 = vld [vmem:[%s6] sm:$0x1]
    %v275 = vlaneseq
    %v276 = vshrl.u32 %v275, 7
    %v277 = vsub.s32 0, %v276
    %v278 = vrot.slane %v273, %v277
    %280 = vmatprep.subr.mxu0 0.0
    %281 = vmatpush1.msra.mxu0 %v257
    %282 = vmatprep.subr.mxu0 0.0
    %283 = vmatpush1.msra.mxu0 %v258
    %284 = vmatprep.subr.mxu0 0.0
    %285 = vmatpush1.msra.mxu0 %v259
    %286 = vmatprep.subr.mxu0 0.0
    %287 = vmatpush1.msra.mxu0 %v260
    %288 = vmatprep.subr.mxu0 0.0
    %289 = vmatpush1.msra.mxu0 %v261
    %290 = vmatprep.subr.mxu0 0.0
    %291 = vmatpush1.msra.mxu0 %v262
    %292 = vmatprep.subr.mxu0 0.0
    %293 = vmatpush1.msra.mxu0 %v263
    %294 = vmatprep.subr.mxu0 0.0
    %295 = vmatpush1.msra.mxu0 %v264
    %296 = vmatprep.subr.mxu0 0.0
    %297 = vmatpush1.msra.mxu0 %v265
    %298 = vmatprep.subr.mxu0 0.0
    %299 = vmatpush1.msra.mxu0 %v266
    %300 = vmatprep.subr.mxu0 0.0
    %301 = vmatpush1.msra.mxu0 %v267
    %302 = vmatprep.subr.mxu0 0.0
    %303 = vmatpush1.msra.mxu0 %v268
    %304 = vmatprep.subr.mxu0 0.0
    %305 = vmatpush1.msra.mxu0 %v269
    %306 = vmatprep.subr.mxu0 0.0
    %307 = vmatpush1.msra.mxu0 %v270
    %308 = vmatprep.subr.mxu0 0.0
    %309 = vmatpush1.msra.mxu0 %v271
    %310 = vmatprep.subr.mxu0 0.0
    %311 = vmatpush1.msra.mxu0 %v272
    %312 = vmatprep.subr.mxu0 0.0
    %313 = vmatpush1.msra.mxu0 0.0
    %314 = vmatprep.subr.mxu0 0.0
    %315 = vmatpush1.msra.mxu0 0.0
    %316 = vmatprep.subr.mxu0 0.0
    %317 = vmatpush1.msra.mxu0 0.0
    %318 = vmatprep.subr.mxu0 0.0
    %319 = vmatpush1.msra.mxu0 0.0
    %320 = vmatprep.subr.mxu0 0.0
    %321 = vmatpush1.msra.mxu0 0.0
    %322 = vmatprep.subr.mxu0 0.0
    %323 = vmatpush1.msra.mxu0 0.0
    %324 = vmatprep.subr.mxu0 0.0
    %325 = vmatpush1.msra.mxu0 0.0
    %326 = vmatprep.subr.mxu0 0.0
    %327 = vmatpush1.msra.mxu0 0.0
    %328 = vmatprep.subr.mxu0 0.0
    %329 = vmatpush1.msra.mxu0 0.0
    %330 = vmatprep.subr.mxu0 0.0
    %331 = vmatpush1.msra.mxu0 0.0
    %332 = vmatprep.subr.mxu0 0.0
    %333 = vmatpush1.msra.mxu0 0.0
    %334 = vmatprep.subr.mxu0 0.0
    %335 = vmatpush1.msra.mxu0 0.0
    %336 = vmatprep.subr.mxu0 0.0
    %337 = vmatpush1.msra.mxu0 0.0
    %338 = vmatprep.subr.mxu0 0.0
    %339 = vmatpush1.msra.mxu0 0.0
    %340 = vmatprep.subr.mxu0 0.0
    %341 = vmatpush1.msra.mxu0 0.0
    %342 = vmatprep.subr.mxu0 0.0
    %343 = vmatpush1.msra.mxu0 0.0
    %344 = vmatprep.mubr.f32.mxu0 0.0
    %345 = vmatmul.mubr.f32.gmra.mrb[0].mxu0 %v256
    %v346 = vpop.f32.mrb[0].mxu0
    %v347 = vadd.f32 %v278, %v346
    %v348 = vpop.f32.mrb[0].mxu0
    %349 = vdwg.mxu0
    %350 = vst [vmem:[#allocation8] sm:$0xff] %v347
    // Predicated region
    $region42: #{mlp_layer_packed.1} parent=1 // pred_check
      _
    $region43: #{mlp_layer_packed.1} parent=1 // pred_check_branch
      %352 = sbr.rel (0) target = $region45
    $region44: #{mlp_layer_packed.1} parent=1 // pred_region
      %s354 = ssub.s32 128, 128
      %355 = vsyncadd [#allocation4], %s354
      %s357 = sshll.u32 [#allocation8], 4
      %s358 = int_to_ptr.vmem [resolvable:$true] %s357
      %360 = dma.vmem_to_hbm [thread:$0]  %s358, 128, %s7, [#allocation4]
    $region45: #{mlp_layer_packed.1} parent=1 // pred_fallthru
      _
    // Predicated region
    $region46: #{mlp_layer_packed.1} parent=1 // pred_check
      _
    $region47: #{mlp_layer_packed.1} parent=1 // pred_check_branch
      %362 = sbr.rel (0) target = $region49
    $region48: #{mlp_layer_packed.1} parent=1 // pred_region
      %363 = dma.done [#allocation4], 128
    $region49: #{mlp_layer_packed.1} parent=1 // pred_fallthru
      _
    %364 = vsyncpa [#allocation3], 1
    %365 = vsyncpa [#allocation6], 1
    %366 = vsyncpa [#allocation4], 1

</llo_original>
